<compile_context>
chip_gen: v7x
topology: tpu7x:2x2x1
jax: 0.10.0
libtpu: 0.0.40
codegen_flags: <defaults>
</compile_context>

<pallas_src>
import functools

import jax
import jax.numpy as jnp
from jax.experimental import pallas as pl
from jax.experimental.pallas import tpu as pltpu


def _attn_decoder_kernel(z_ref, mask_ref, wa_t_ref, ba_ref, va_ref,
                         w1_t_ref, b1_ref, predict_ref, attn_ref, *,
                         batch_size, block_batch, guard_tail, compute_dtype):
    tb, t, d2 = z_ref.shape
    h_pad = wa_t_ref.shape[1]

    z = z_ref[...]                                     # (TB, T, 2H) caller dtype
    mask = mask_ref[...]                               # (TB, T) f32

    if guard_tail:
        # Ragged last batch block: rows >= batch_size hold unspecified data.
        # Zero their mask so they cannot produce Inf/NaN (their outputs are
        # dropped by the bounded writeback anyway) -- cheap insurance.
        row0 = pl.program_id(0) * block_batch
        rows = row0 + jax.lax.broadcasted_iota(jnp.int32, mask.shape, 0)
        mask = jnp.where(rows < batch_size, mask, 0.0)

    # ---- score projection: ONE flattened (TB*T, 2H) x (2H, H_pad) MXU matmul.
    # Operands in compute_dtype (bf16 default -> native MXU path on every
    # generation, including v5e); accumulation stays f32.
    z_mx = z.astype(compute_dtype).reshape(tb * t, d2)
    pre = jnp.dot(z_mx, wa_t_ref[...], preferred_element_type=jnp.float32)
    h = jnp.tanh(pre + ba_ref[...])                    # (TB*T, H_pad) f32, tanh on EUP
    # Lane-padded H columns: pre == 0, ba == 0, va == 0 -> contribute exactly 0.

    # ---- score vector (N=1 contraction) on VPU + XLU: sum_h h * v ----
    s = jnp.sum(h.reshape(tb, t, h_pad) * va_ref[...][None], axis=-1)   # (TB, T)

    # ---- mask + numerically stable softmax over time ----
    s = jnp.where(mask > 0, s, jnp.float32(-1e9))
    m = jnp.max(s, axis=-1, keepdims=True)             # (TB, 1)
    e = jnp.exp(s - m)
    denom = jnp.sum(e, axis=-1, keepdims=True)
    r = pl.reciprocal(denom, approx=True)              # EUP slot (nearly free)
    r = r * (2.0 - denom * r)                          # one Newton step -> ~f32 exact
    attn = e * r                                       # (TB, T)
    attn_ref[...] = attn.astype(attn_ref.dtype)

    # ---- context (M=1 contraction) on VPU + XLU, f32 for accuracy ----
    context = jnp.sum(attn[:, :, None] * z.astype(jnp.float32), axis=1)  # (TB, 2H)

    # ---- decode: (TB, 2H) x (2H, O_pad) MXU matmul, lane-dense store ----
    predict = jnp.dot(context, w1_t_ref[...],
                      preferred_element_type=jnp.float32) + b1_ref[...]
    predict_ref[...] = predict.astype(predict_ref.dtype)


def attn_decoder_forward(z, masks, params, *, compute_dtype=jnp.bfloat16):
    """AttnDecoder forward via a Pallas TPU kernel. Returns (predict, attn).

    compute_dtype: dtype of the score-matmul MXU operands (z tile, Wa^T).  bf16 is
    the default on every generation (MXU is bf16-native; accumulation is f32).
    z is cast in-kernel, so its HBM traffic stays at the caller's dtype -- pass
    bf16 z from the producer to also halve the dominant HBM read.
    """
    z = jnp.asarray(z)
    masks = jnp.asarray(masks, jnp.float32)
    B, T, D2 = z.shape
    H = params['wa'].shape[0]
    O = params['w1'].shape[0]
    assert D2 == 2 * H

    LANE = 128
    F32 = 4
    H_pad = ((H + LANE - 1) // LANE) * LANE            # lane-dense score width
    O_pad = ((O + LANE - 1) // LANE) * LANE            # lane-dense predict slab

    # Wrapper-side weight prep (tiny, one-off): transpose, cast MXU operand,
    # zero-pad to lane-dense widths.  Decode weights stay f32 (small, and keeps
    # the final projection full-precision).
    wa_t = jnp.zeros((D2, H_pad), compute_dtype).at[:, :H].set(
        params['wa'].T.astype(compute_dtype))
    ba = jnp.zeros((1, H_pad), jnp.float32).at[:, :H].set(params['ba'])
    va = jnp.zeros((1, H_pad), jnp.float32).at[:, :H].set(params['va'])
    w1_t = jnp.zeros((D2, O_pad), jnp.float32).at[:, :O].set(params['w1'].T)
    b1 = jnp.zeros((1, O_pad), jnp.float32).at[:, :O].set(params['b1'])

    # ---- generation-aware VMEM budget ----
    try:
        vmem_cap = int(pltpu.get_tpu_info().vmem_capacity_bytes)
    except Exception:
        vmem_cap = 64 * 1024 * 1024                    # conservative (v7x per-core)
    if vmem_cap >= 96 * 1024 * 1024:                   # v5e / v6e: 128 MiB physical
        vmem_limit = 80 * 1024 * 1024
    else:                                              # v7x: 64 MiB per TensorCore
        vmem_limit = 32 * 1024 * 1024

    # ---- batch tile from the full per-block footprint (not just the z bytes) ----
    z_isz = jnp.dtype(z.dtype).itemsize
    cz = jnp.dtype(compute_dtype).itemsize
    per_row = T * (2 * D2 * z_isz                      # z block (double-buffered)
                   + D2 * cz                           # in-kernel cast to MXU dtype
                   + 2 * D2 * F32                      # f32 z upcast + attn*z product
                   + 3 * H_pad * F32                   # pre / tanh / h*v intermediates
                   + 6 * F32)                          # mask + attn in/out blocks
    per_row += 2 * O_pad * F32                         # predict out block
    weight_bytes = (D2 * H_pad * cz + D2 * O_pad * F32
                    + (2 * H_pad + 2 * O_pad) * F32)   # single-buffered (Buffered(1))
    usable = int(vmem_limit * 0.6) - weight_bytes      # slack for Mosaic scratch/regs
    TB = max(usable, 0) // per_row
    if TB >= B:
        TB = B                                         # whole batch in one block
    else:
        TB = max(8, (TB // 8) * 8)                     # multiple of 8 sublanes
        TB = min(TB, B)
    n_blocks = (B + TB - 1) // TB
    guard_tail = (B % TB) != 0                         # ragged last block?

    needed = weight_bytes + TB * per_row
    if needed > int(vmem_limit * 0.6):
        # Long-T fallback: even the minimum block exceeds the default budget;
        # raise the limit toward physical capacity.
        # TODO(synk): tile T with an online-softmax accumulator so the per-block
        # VMEM footprint is independent of T (matters first on v7x's 64 MiB).
        vmem_limit = min(int(vmem_cap * 0.9),
                         max(vmem_limit, int(needed / 0.6)))

    kernel = functools.partial(
        _attn_decoder_kernel, batch_size=B, block_batch=TB,
        guard_tail=guard_tail, compute_dtype=compute_dtype)

    # Replicated weight/bias blocks never change -> single-buffer them to save VMEM.
    rep = dict(pipeline_mode=pl.Buffered(1))

    predict_pad, attn = pl.pallas_call(
        kernel,
        out_shape=(
            jax.ShapeDtypeStruct((B, O_pad), jnp.float32),   # predict (lane-padded)
            jax.ShapeDtypeStruct((B, T), jnp.float32),       # attn
        ),
        grid=(n_blocks,),
        in_specs=[
            pl.BlockSpec((TB, T, D2), lambda i: (i, 0, 0)),            # z (batch-tiled)
            pl.BlockSpec((TB, T), lambda i: (i, 0)),                   # masks
            pl.BlockSpec((D2, H_pad), lambda i: (0, 0), **rep),        # Wa^T (padded)
            pl.BlockSpec((1, H_pad), lambda i: (0, 0), **rep),         # ba (padded)
            pl.BlockSpec((1, H_pad), lambda i: (0, 0), **rep),         # v  (padded)
            pl.BlockSpec((D2, O_pad), lambda i: (0, 0), **rep),        # W1^T (padded)
            pl.BlockSpec((1, O_pad), lambda i: (0, 0), **rep),         # b1 (padded)
        ],
        out_specs=[
            pl.BlockSpec((TB, O_pad), lambda i: (i, 0)),               # predict
            pl.BlockSpec((TB, T), lambda i: (i, 0)),                   # attn
        ],
        compiler_params=pltpu.CompilerParams(
            dimension_semantics=("parallel",),         # shards across TCs on v7x
            vmem_limit_bytes=int(vmem_limit),
        ),
    )(z, masks, wa_t, ba, va, w1_t, b1)
    return predict_pad[:, :O], attn


def _reference_forward(z, masks, params, compute_dtype=jnp.float32):
    """Plain-JAX reference (optionally matching the kernel's MXU operand dtype)."""
    z32 = jnp.asarray(z, jnp.float32)
    z_mx = z32.astype(compute_dtype)
    wa_mx = params['wa'].astype(compute_dtype)
    pre = jnp.einsum('btd,hd->bth', z_mx, wa_mx, preferred_element_type=jnp.float32)
    h = jnp.tanh(pre + params['ba'][None])
    s = jnp.einsum('bth,oh->bto', h, params['va'])[:, :, 0] + params['bva'][0, 0]
    s = jnp.where(masks > 0, s, -1e9)
    attn = jax.nn.softmax(s, axis=1)
    context = jnp.einsum('bt,btd->bd', attn, z32)
    predict = context @ params['w1'].T + params['b1']
    return predict, attn


def init_params(key, hidden_size, output_size):
    H, O = hidden_size, output_size
    ks = jax.random.split(key, 6)
    scale = 0.1
    return {
        # Attention: Linear(2H -> H), then score vector Linear(H -> 1)
        'wa':  (jax.random.normal(ks[0], (H, 2 * H)) * scale).astype(jnp.float32),
        'ba':  (jax.random.normal(ks[1], (1, H)) * scale).astype(jnp.float32),
        'va':  (jax.random.normal(ks[2], (1, H)) * scale).astype(jnp.float32),
        'bva': (jax.random.normal(ks[3], (1, 1)) * scale).astype(jnp.float32),
        # linear_1: Linear(2H -> output_size)
        'w1':  (jax.random.normal(ks[4], (O, 2 * H)) * scale).astype(jnp.float32),
        'b1':  (jax.random.normal(ks[5], (1, O)) * scale).astype(jnp.float32),
    }


if __name__ == "__main__":
    B, T, H, O = 2, 8, 32, 1
    key = jax.random.PRNGKey(0)
    k_p, k_z = jax.random.split(key)

    params = init_params(k_p, H, O)
    z = jax.random.normal(k_z, (B, T, 2 * H), dtype=jnp.float32)

    # masks: 1.0 = valid; pad out the last two timesteps of the second sequence
    masks = jnp.ones((B, T), dtype=jnp.float32)
    masks = masks.at[1, T - 2:].set(0.0)

    # f32 MXU operands: tight check against the pure f32 reference.
    p32, a32 = attn_decoder_forward(z, masks, params, compute_dtype=jnp.float32)
    jax.block_until_ready((p32, a32))
    rp32, ra32 = _reference_forward(z, masks, params, compute_dtype=jnp.float32)
    assert p32.shape == (B, O) and a32.shape == (B, T)
    assert jnp.allclose(a32, ra32, atol=2e-4, rtol=2e-4)
    assert jnp.allclose(p32, rp32, atol=2e-4, rtol=2e-4)

    # Default path: bf16 MXU operands (f32 accumulation / softmax / context).
    pbf, abf = attn_decoder_forward(z, masks, params)
    jax.block_until_ready((pbf, abf))
    rpbf, rabf = _reference_forward(z, masks, params, compute_dtype=jnp.bfloat16)
    assert jnp.allclose(abf, rabf, atol=1e-3, rtol=1e-3)      # vs matched-precision ref
    assert jnp.allclose(pbf, rpbf, atol=1e-3, rtol=1e-3)
    assert jnp.allclose(pbf, rp32, atol=3e-2, rtol=3e-2)      # still close to pure f32
    assert jnp.allclose(jnp.sum(abf, axis=1), 1.0, atol=1e-4)

    print("KERNEL_OK")
</pallas_src>

<mosaic_0001>
module attributes {stable_mosaic.version = 11 : i64} {
  func.func @_attn_decoder_kernel(%arg0: i32, %arg1: memref<2x8x64xf32, #tpu.memory_space<vmem>>, %arg2: memref<2x8xf32, #tpu.memory_space<vmem>>, %arg3: memref<64x128xf32, #tpu.memory_space<vmem>>, %arg4: memref<1x128xf32, #tpu.memory_space<vmem>>, %arg5: memref<1x128xf32, #tpu.memory_space<vmem>>, %arg6: memref<64x128xf32, #tpu.memory_space<vmem>>, %arg7: memref<1x128xf32, #tpu.memory_space<vmem>>, %arg8: memref<2x128xf32, #tpu.memory_space<vmem>>, %arg9: memref<2x8xf32, #tpu.memory_space<vmem>>) attributes {dimension_semantics = [#tpu.dimension_semantics<parallel>], iteration_bounds = array<i64: 1>, scalar_prefetch = 0 : i64, scratch_operands = 0 : i64, tpu.core_type = #tpu.core_type<tc>, window_params = [{transform_indices = @transform_0, window_bounds = array<i64: 2, 8, 64>}, {transform_indices = @transform_1, window_bounds = array<i64: 2, 8>}, {pipeline_mode = #tpu.pipeline_mode<synchronous>, transform_indices = @transform_2, window_bounds = array<i64: 64, 128>}, {pipeline_mode = #tpu.pipeline_mode<synchronous>, transform_indices = @transform_3, window_bounds = array<i64: 1, 128>}, {pipeline_mode = #tpu.pipeline_mode<synchronous>, transform_indices = @transform_4, window_bounds = array<i64: 1, 128>}, {pipeline_mode = #tpu.pipeline_mode<synchronous>, transform_indices = @transform_5, window_bounds = array<i64: 64, 128>}, {pipeline_mode = #tpu.pipeline_mode<synchronous>, transform_indices = @transform_6, window_bounds = array<i64: 1, 128>}, {transform_indices = @transform_7, window_bounds = array<i64: 2, 128>}, {transform_indices = @transform_8, window_bounds = array<i64: 2, 8>}]} {
    %c0 = arith.constant 0 : index
    %c0_0 = arith.constant 0 : index
    %c0_1 = arith.constant 0 : index
    %0 = vector.load %arg1[%c0, %c0_0, %c0_1] : memref<2x8x64xf32, #tpu.memory_space<vmem>>, vector<2x8x64xf32>
    %c0_2 = arith.constant 0 : index
    %c0_3 = arith.constant 0 : index
    %1 = vector.load %arg2[%c0_2, %c0_3] : memref<2x8xf32, #tpu.memory_space<vmem>>, vector<2x8xf32>
    %2 = vector.shape_cast %0 : vector<2x8x64xf32> to vector<16x64xf32>
    %c0_4 = arith.constant 0 : index
    %c0_5 = arith.constant 0 : index
    %3 = vector.load %arg3[%c0_4, %c0_5] : memref<64x128xf32, #tpu.memory_space<vmem>>, vector<64x128xf32>
    %cst = arith.constant dense<0.000000e+00> : vector<16x128xf32>
    %4 = tpu.matmul %2, %3, %cst {dimension_numbers = #tpu.dot_dimension_numbers<[1], [0], [0], [1], [0, 0, 1, 1], [], []>} : vector<16x64xf32>, vector<64x128xf32>, vector<16x128xf32> -> vector<16x128xf32>
    %c0_6 = arith.constant 0 : index
    %c0_7 = arith.constant 0 : index
    %5 = vector.load %arg4[%c0_6, %c0_7] : memref<1x128xf32, #tpu.memory_space<vmem>>, vector<1x128xf32>
    %6 = vector.broadcast %5 : vector<1x128xf32> to vector<16x128xf32>
    %7 = arith.addf %4, %6 : vector<16x128xf32>
    %8 = math.tanh %7 : vector<16x128xf32>
    %9 = vector.shape_cast %8 : vector<16x128xf32> to vector<2x8x128xf32>
    %c0_8 = arith.constant 0 : index
    %c0_9 = arith.constant 0 : index
    %10 = vector.load %arg5[%c0_8, %c0_9] : memref<1x128xf32, #tpu.memory_space<vmem>>, vector<1x128xf32>
    %11 = vector.shape_cast %10 : vector<1x128xf32> to vector<1x1x128xf32>
    %12 = vector.broadcast %11 : vector<1x1x128xf32> to vector<2x8x128xf32>
    %13 = arith.mulf %9, %12 : vector<2x8x128xf32>
    %cst_10 = arith.constant dense<0.000000e+00> : vector<2x8xf32>
    %14 = vector.multi_reduction <add>, %13, %cst_10 [2] : vector<2x8x128xf32> to vector<2x8xf32>
    %cst_11 = arith.constant 0.000000e+00 : f32
    %15 = vector.broadcast %cst_11 : f32 to vector<2x8xf32>
    %16 = arith.cmpf ogt, %1, %15 : vector<2x8xf32>
    %cst_12 = arith.constant -1.000000e+09 : f32
    %17 = vector.broadcast %cst_12 : f32 to vector<2x8xf32>
    %18 = arith.select %16, %14, %17 : vector<2x8xi1>, vector<2x8xf32>
    %cst_13 = arith.constant dense<0xFF800000> : vector<2xf32>
    %19 = vector.multi_reduction <maximumf>, %18, %cst_13 [1] : vector<2x8xf32> to vector<2xf32>
    %20 = vector.shape_cast %19 : vector<2xf32> to vector<2x1xf32>
    %21 = vector.broadcast %20 : vector<2x1xf32> to vector<2x8xf32>
    %22 = arith.subf %18, %21 : vector<2x8xf32>
    %23 = math.exp %22 : vector<2x8xf32>
    %cst_14 = arith.constant dense<0.000000e+00> : vector<2xf32>
    %24 = vector.multi_reduction <add>, %23, %cst_14 [1] : vector<2x8xf32> to vector<2xf32>
    %25 = vector.shape_cast %24 : vector<2xf32> to vector<2x1xf32>
    %26 = tpu.reciprocal %25 {approx = true} : vector<2x1xf32> -> vector<2x1xf32>
    %27 = arith.mulf %25, %26 : vector<2x1xf32>
    %cst_15 = arith.constant 2.000000e+00 : f32
    %28 = vector.broadcast %cst_15 : f32 to vector<2x1xf32>
    %29 = arith.subf %28, %27 : vector<2x1xf32>
    %30 = arith.mulf %26, %29 : vector<2x1xf32>
    %31 = vector.broadcast %30 : vector<2x1xf32> to vector<2x8xf32>
    %32 = arith.mulf %23, %31 : vector<2x8xf32>
    %c0_16 = arith.constant 0 : index
    %c0_17 = arith.constant 0 : index
    %33 = vector.load %arg9[%c0_16, %c0_17] : memref<2x8xf32, #tpu.memory_space<vmem>>, vector<2x8xf32>
    tpu.vector_store %arg9[%c0_16, %c0_17], %32 {strides = array<i32>} : memref<2x8xf32, #tpu.memory_space<vmem>>, vector<2x8xf32>,
    %34 = vector.shape_cast %32 : vector<2x8xf32> to vector<2x8x1xf32>
    %35 = vector.broadcast %34 : vector<2x8x1xf32> to vector<2x8x64xf32>
    %36 = arith.mulf %35, %0 : vector<2x8x64xf32>
    %cst_18 = arith.constant dense<0.000000e+00> : vector<2x64xf32>
    %37 = vector.multi_reduction <add>, %36, %cst_18 [1] : vector<2x8x64xf32> to vector<2x64xf32>
    %c0_19 = arith.constant 0 : index
    %c0_20 = arith.constant 0 : index
    %38 = vector.load %arg6[%c0_19, %c0_20] : memref<64x128xf32, #tpu.memory_space<vmem>>, vector<64x128xf32>
    %cst_21 = arith.constant dense<0.000000e+00> : vector<2x128xf32>
    %39 = tpu.matmul %37, %38, %cst_21 {dimension_numbers = #tpu.dot_dimension_numbers<[1], [0], [0], [1], [0, 0, 1, 1], [], []>} : vector<2x64xf32>, vector<64x128xf32>, vector<2x128xf32> -> vector<2x128xf32>
    %c0_22 = arith.constant 0 : index
    %c0_23 = arith.constant 0 : index
    %40 = vector.load %arg7[%c0_22, %c0_23] : memref<1x128xf32, #tpu.memory_space<vmem>>, vector<1x128xf32>
    %41 = vector.broadcast %40 : vector<1x128xf32> to vector<2x128xf32>
    %42 = arith.addf %39, %41 : vector<2x128xf32>
    %c0_24 = arith.constant 0 : index
    %c0_25 = arith.constant 0 : index
    %43 = vector.load %arg8[%c0_24, %c0_25] : memref<2x128xf32, #tpu.memory_space<vmem>>, vector<2x128xf32>
    tpu.vector_store %arg8[%c0_24, %c0_25], %42 {strides = array<i32>} : memref<2x128xf32, #tpu.memory_space<vmem>>, vector<2x128xf32>,
    return
  }
  func.func @transform_0(%arg0: i32) -> (i32, i32, i32) {
    %c0_i32 = arith.constant 0 : i32
    %c0_i32_0 = arith.constant 0 : i32
    %c0_i32_1 = arith.constant 0 : i32
    return %arg0, %c0_i32, %c0_i32_0 : i32, i32, i32
  }
  func.func @transform_1(%arg0: i32) -> (i32, i32) {
    %c0_i32 = arith.constant 0 : i32
    %c0_i32_0 = arith.constant 0 : i32
    return %arg0, %c0_i32 : i32, i32
  }
  func.func @transform_2(%arg0: i32) -> (i32, i32) {
    %c0_i32 = arith.constant 0 : i32
    %c0_i32_0 = arith.constant 0 : i32
    %c0_i32_1 = arith.constant 0 : i32
    return %c0_i32, %c0_i32_0 : i32, i32
  }
  func.func @transform_3(%arg0: i32) -> (i32, i32) {
    %c0_i32 = arith.constant 0 : i32
    %c0_i32_0 = arith.constant 0 : i32
    %c0_i32_1 = arith.constant 0 : i32
    return %c0_i32, %c0_i32_0 : i32, i32
  }
  func.func @transform_4(%arg0: i32) -> (i32, i32) {
    %c0_i32 = arith.constant 0 : i32
    %c0_i32_0 = arith.constant 0 : i32
    %c0_i32_1 = arith.constant 0 : i32
    return %c0_i32, %c0_i32_0 : i32, i32
  }
  func.func @transform_5(%arg0: i32) -> (i32, i32) {
    %c0_i32 = arith.constant 0 : i32
    %c0_i32_0 = arith.constant 0 : i32
    %c0_i32_1 = arith.constant 0 : i32
    return %c0_i32, %c0_i32_0 : i32, i32
  }
  func.func @transform_6(%arg0: i32) -> (i32, i32) {
    %c0_i32 = arith.constant 0 : i32
    %c0_i32_0 = arith.constant 0 : i32
    %c0_i32_1 = arith.constant 0 : i32
    return %c0_i32, %c0_i32_0 : i32, i32
  }
  func.func @transform_7(%arg0: i32) -> (i32, i32) {
    %c0_i32 = arith.constant 0 : i32
    %c0_i32_0 = arith.constant 0 : i32
    return %arg0, %c0_i32 : i32, i32
  }
  func.func @transform_8(%arg0: i32) -> (i32, i32) {
    %c0_i32 = arith.constant 0 : i32
    %c0_i32_0 = arith.constant 0 : i32
    return %arg0, %c0_i32 : i32, i32
  }
}

</mosaic_0001>

<llo_original>
// kernel: tpu_custom_call.1
$region0: #{tpu_custom_call.1}
  #allocation0 [shape = 'u32[]', space=smem, size = 0x4, offset = 0x4, fixed_abs, tag = 'smem constant byte address 0x4 - core index']
  #allocation1 [shape = 'u32[144,128]{1,0:T(1,128)}', space=vmem, size = 0x12000, scoped, tag = 'internal scratch']
  %s0 = inlined_call_operand.hbm [shape: f32[2,8,64], index: 0, kind: input, shape index: {}]
  %s1 = inlined_call_operand.vmem [shape: f32[2,8], index: 1, kind: input, shape index: {}]
  %s2 = inlined_call_operand.hbm [shape: f32[64,128], index: 2, kind: input, shape index: {}]
  %s3 = inlined_call_operand.vmem [shape: f32[1,128], index: 3, kind: input, shape index: {}]
  %s4 = inlined_call_operand.vmem [shape: f32[1,128], index: 4, kind: input, shape index: {}]
  %s5 = inlined_call_operand.hbm [shape: f32[64,128], index: 5, kind: input, shape index: {}]
  %s6 = inlined_call_operand.vmem [shape: f32[1,128], index: 6, kind: input, shape index: {}]
  %s7 = inlined_call_operand.hbm [shape: f32[2,128], index: 7, kind: output, shape index: {0}]
  %s8 = inlined_call_operand.hbm [shape: f32[2,8], index: 8, kind: output, shape index: {1}]
  %9 = xla_tuple %s7, %s8
  %s10 = sld [smem:[#allocation0]]
  $region58: #{tpu_custom_call.1} parent=0
    _
  %s12 = ssub.s32 1, %s10
  %s13 = scalar_select 0, %s12, %s10
  $region1: #{tpu_custom_call.1} parent=0
    #allocation2 [shape = 'u8[8192]{0}', space=vmem, size = 0x2000, scoped, tag = 'input window, operand 0, single buffered']
    #allocation3 [shape = 's32[1]{0}', space=sflag, size = 0x4, scoped, tag = 'scoped memory for tpu_custom_call.1']
    #allocation4 [shape = 's32[1]{0}', space=sflag, size = 0x4, scoped, tag = 'scoped memory for tpu_custom_call.1']
    #allocation5 [shape = 'u8[32768]{0}', space=vmem, size = 0x8000, scoped, tag = 'input window, operand 2, single buffered']
    #allocation6 [shape = 's32[1]{0}', space=sflag, size = 0x4, scoped, tag = 'scoped memory for tpu_custom_call.1']
    #allocation7 [shape = 'u8[32768]{0}', space=vmem, size = 0x8000, scoped, tag = 'input window, operand 5, single buffered']
    #allocation8 [shape = 'u8[1024]{0}', space=vmem, size = 0x400, scoped, tag = 'output window, operand 0, single buffered']
    #allocation9 [shape = 'u8[1024]{0}', space=vmem, size = 0x400, scoped, tag = 'output window, operand 1, single buffered']
    #allocation10 [shape = 's32[1]{0}', space=sflag, size = 0x4, scoped, tag = 'scoped memory for tpu_custom_call.1']
    %14 = vsyncpa [#allocation3], 0
    %15 = vsyncpa [#allocation6], 0
    %16 = vsyncpa [#allocation4], 0
    %17 = vsyncpa [#allocation10], 0
    // Predicated region
    $region2: #{tpu_custom_call.1} parent=1 // pred_check
      _
    $region3: #{tpu_custom_call.1} parent=1 // pred_check_branch
      %19 = sbr.rel (0) target = $region5
    $region4: #{tpu_custom_call.1} parent=1 // pred_region
      %s21 = ssub.s32 256, 256
      %22 = vsyncadd [#allocation3], %s21
      %s23 = sshll.u32 [#allocation2], 4
      %s24 = int_to_ptr.vmem [resolvable:$true] %s23
      %29 = dma.hbm_to_vmem [thread:$0]  %s0, 256, %s24, [#allocation3], 128, 128, 8
    $region5: #{tpu_custom_call.1} parent=1 // pred_fallthru
      _
    // Predicated region
    $region6: #{tpu_custom_call.1} parent=1 // pred_check
      _
    $region7: #{tpu_custom_call.1} parent=1 // pred_check_branch
      %31 = sbr.rel (0) target = $region9
    $region8: #{tpu_custom_call.1} parent=1 // pred_region
      _
    $region9: #{tpu_custom_call.1} parent=1 // pred_fallthru
      _
    // Predicated region
    $region10: #{tpu_custom_call.1} parent=1 // pred_check
      _
    $region11: #{tpu_custom_call.1} parent=1 // pred_check_branch
      %33 = sbr.rel (0) target = $region13
    $region12: #{tpu_custom_call.1} parent=1 // pred_region
      %s35 = ssub.s32 1024, 1024
      %36 = vsyncadd [#allocation6], %s35
      %s37 = sshll.u32 [#allocation5], 4
      %s38 = int_to_ptr.vmem [resolvable:$true] %s37
      %43 = dma.hbm_to_vmem [thread:$0]  %s2, 1024, %s38, [#allocation6], 128, 128, 8
    $region13: #{tpu_custom_call.1} parent=1 // pred_fallthru
      _
    // Predicated region
    $region14: #{tpu_custom_call.1} parent=1 // pred_check
      _
    $region15: #{tpu_custom_call.1} parent=1 // pred_check_branch
      %45 = sbr.rel (0) target = $region17
    $region16: #{tpu_custom_call.1} parent=1 // pred_region
      _
    $region17: #{tpu_custom_call.1} parent=1 // pred_fallthru
      _
    // Predicated region
    $region18: #{tpu_custom_call.1} parent=1 // pred_check
      _
    $region19: #{tpu_custom_call.1} parent=1 // pred_check_branch
      %47 = sbr.rel (0) target = $region21
    $region20: #{tpu_custom_call.1} parent=1 // pred_region
      _
    $region21: #{tpu_custom_call.1} parent=1 // pred_fallthru
      _
    // Predicated region
    $region22: #{tpu_custom_call.1} parent=1 // pred_check
      _
    $region23: #{tpu_custom_call.1} parent=1 // pred_check_branch
      %49 = sbr.rel (0) target = $region25
    $region24: #{tpu_custom_call.1} parent=1 // pred_region
      %s51 = ssub.s32 1024, 1024
      %52 = vsyncadd [#allocation6], %s51
      %s53 = sshll.u32 [#allocation7], 4
      %s54 = int_to_ptr.vmem [resolvable:$true] %s53
      %59 = dma.hbm_to_vmem [thread:$0]  %s5, 1024, %s54, [#allocation6], 128, 128, 8
    $region25: #{tpu_custom_call.1} parent=1 // pred_fallthru
      _
    // Predicated region
    $region26: #{tpu_custom_call.1} parent=1 // pred_check
      _
    $region27: #{tpu_custom_call.1} parent=1 // pred_check_branch
      %61 = sbr.rel (0) target = $region29
    $region28: #{tpu_custom_call.1} parent=1 // pred_region
      _
    $region29: #{tpu_custom_call.1} parent=1 // pred_fallthru
      _
    // Predicated region
    $region30: #{tpu_custom_call.1} parent=1 // pred_check
      _
    $region31: #{tpu_custom_call.1} parent=1 // pred_check_branch
      %63 = sbr.rel (0) target = $region33
    $region32: #{tpu_custom_call.1} parent=1 // pred_region
      %64 = dma.done [#allocation3], 256
    $region33: #{tpu_custom_call.1} parent=1 // pred_fallthru
      _
    // Predicated region
    $region34: #{tpu_custom_call.1} parent=1 // pred_check
      _
    $region35: #{tpu_custom_call.1} parent=1 // pred_check_branch
      %66 = sbr.rel (0) target = $region37
    $region36: #{tpu_custom_call.1} parent=1 // pred_region
      %67 = dma.done [#allocation6], 1024
    $region37: #{tpu_custom_call.1} parent=1 // pred_fallthru
      _
    // Predicated region
    $region38: #{tpu_custom_call.1} parent=1 // pred_check
      _
    $region39: #{tpu_custom_call.1} parent=1 // pred_check_branch
      %69 = sbr.rel (0) target = $region41
    $region40: #{tpu_custom_call.1} parent=1 // pred_region
      %70 = dma.done [#allocation6], 1024
    $region41: #{tpu_custom_call.1} parent=1 // pred_fallthru
      _
    %v71 = vld [vmem:[#allocation2] sm:$0xff]
    %v72 = vld [vmem:[#allocation2 + $0x8] sm:$0xff]
    %v73 = vld [vmem:[%s1] sm:$0x3]
    %v74 = vld [vmem:[#allocation5] sm:$0xff]
    %v75 = vld [vmem:[#allocation5 + $0x8] sm:$0xff]
    %v76 = vld [vmem:[#allocation5 + $0x10] sm:$0xff]
    %v77 = vld [vmem:[#allocation5 + $0x18] sm:$0xff]
    %v78 = vld [vmem:[#allocation5 + $0x20] sm:$0xff]
    %v79 = vld [vmem:[#allocation5 + $0x28] sm:$0xff]
    %v80 = vld [vmem:[#allocation5 + $0x30] sm:$0xff]
    %v81 = vld [vmem:[#allocation5 + $0x38] sm:$0xff]
    %v82 = vld [vmem:[%s3] sm:$0x1]
    %v84 = vlaneseq
    %v85 = vshrl.u32 %v84, 7
    %v86 = vsub.s32 0, %v85
    %v87 = vrot.slane %v82, %v86
    %vm89 = vcmask 523264
    %v91 = vsel %vm89, %v71, 0
    %v94 = vsel %vm89, %v72, 0
    %96 = vmatprep.subr.mxu0 0.0
    %97 = vmatpush1.msra.mxu0 %v74
    %98 = vmatprep.subr.mxu0 0.0
    %99 = vmatpush1.msra.mxu0 %v75
    %100 = vmatprep.subr.mxu0 0.0
    %101 = vmatpush1.msra.mxu0 %v76
    %102 = vmatprep.subr.mxu0 0.0
    %103 = vmatpush1.msra.mxu0 %v77
    %104 = vmatprep.subr.mxu0 0.0
    %105 = vmatpush1.msra.mxu0 %v78
    %106 = vmatprep.subr.mxu0 0.0
    %107 = vmatpush1.msra.mxu0 %v79
    %108 = vmatprep.subr.mxu0 0.0
    %109 = vmatpush1.msra.mxu0 %v80
    %110 = vmatprep.subr.mxu0 0.0
    %111 = vmatpush1.msra.mxu0 %v81
    %112 = vmatprep.subr.mxu0 0.0
    %113 = vmatpush1.msra.mxu0 0.0
    %114 = vmatprep.subr.mxu0 0.0
    %115 = vmatpush1.msra.mxu0 0.0
    %116 = vmatprep.subr.mxu0 0.0
    %117 = vmatpush1.msra.mxu0 0.0
    %118 = vmatprep.subr.mxu0 0.0
    %119 = vmatpush1.msra.mxu0 0.0
    %120 = vmatprep.subr.mxu0 0.0
    %121 = vmatpush1.msra.mxu0 0.0
    %122 = vmatprep.subr.mxu0 0.0
    %123 = vmatpush1.msra.mxu0 0.0
    %124 = vmatprep.subr.mxu0 0.0
    %125 = vmatpush1.msra.mxu0 0.0
    %126 = vmatprep.subr.mxu0 0.0
    %127 = vmatpush1.msra.mxu0 0.0
    %128 = vmatprep.subr.mxu0 0.0
    %129 = vmatpush1.msra.mxu0 0.0
    %130 = vmatprep.subr.mxu0 0.0
    %131 = vmatpush1.msra.mxu0 0.0
    %132 = vmatprep.subr.mxu0 0.0
    %133 = vmatpush1.msra.mxu0 0.0
    %134 = vmatprep.subr.mxu0 0.0
    %135 = vmatpush1.msra.mxu0 0.0
    %136 = vmatprep.subr.mxu0 0.0
    %137 = vmatpush1.msra.mxu0 0.0
    %138 = vmatprep.subr.mxu0 0.0
    %139 = vmatpush1.msra.mxu0 0.0
    %140 = vmatprep.subr.mxu0 0.0
    %141 = vmatpush1.msra.mxu0 0.0
    %142 = vmatprep.subr.mxu0 0.0
    %143 = vmatpush1.msra.mxu0 0.0
    %144 = vmatprep.subr.mxu0 0.0
    %145 = vmatpush1.msra.mxu0 0.0
    %146 = vmatprep.subr.mxu0 0.0
    %147 = vmatpush1.msra.mxu0 0.0
    %148 = vmatprep.subr.mxu0 0.0
    %149 = vmatpush1.msra.mxu0 0.0
    %150 = vmatprep.subr.mxu0 0.0
    %151 = vmatpush1.msra.mxu0 0.0
    %152 = vmatprep.subr.mxu0 0.0
    %153 = vmatpush1.msra.mxu0 0.0
    %154 = vmatprep.subr.mxu0 0.0
    %155 = vmatpush1.msra.mxu0 0.0
    %156 = vmatprep.subr.mxu0 0.0
    %157 = vmatpush1.msra.mxu0 0.0
    %158 = vmatprep.subr.mxu0 0.0
    %159 = vmatpush1.msra.mxu0 0.0
    %160 = vmatprep.mubr.f32.mxu0 0.0
    %161 = vmatmul.mubr.f32.gmra.mrb[0].mxu0 %v91
    %v162 = vpop.f32.mrb[0].mxu0
    %v163 = vadd.f32 %v87, %v162
    %v164 = vpop.f32.mrb[0].mxu0
    %165 = vmatprep.mubr.f32.mxu0 0.0
    %166 = vmatmul.mubr.f32.gmra.mrb[0].mxu0 %v94
    %v167 = vpop.f32.mrb[0].mxu0
    %v168 = vadd.f32 %v87, %v167
    %v169 = vpop.f32.mrb[0].mxu0
    %170 = vdwg.mxu0
    %v171 = vtanh.pop %v163
    %v172 = vtanh.pop %v168
    %v173 = vld [vmem:[%s4] sm:$0x1]
    %v175 = vlaneseq
    %v176 = vshrl.u32 %v175, 7
    %v177 = vsub.s32 0, %v176
    %v178 = vrot.slane %v173, %v177
    %v180 = vmul.f32 %v171, %v178
    %v181 = vmul.f32 %v172, %v178
    %182 = vadd.xlane.f32.xlu0 %v180
    %v183 = vpop.xlane.xlu0 %182
    %184 = vadd.xlane.f32.xlu0 %v181
    %v185 = vpop.xlane.xlu0 %184
    %vm186 = vcmp.gt.f32.partialorder %v73, 0.0
    %v189 = vlaneseq
    %v190 = vand.u32 %v189, 127
    %v191 = vlaneseq
    %v192 = vshrl.u32 %v191, 7
    %v193 = vsub.s32 %v190, %v192
    %v194 = vrot.slane %v183, %v193
    %v195 = vlaneseq
    %v196 = vshrl.u32 %v195, 7
    %v197 = vsub.s32 %v190, %v196
    %v198 = vrot.slane %v185, %v197
    %vm199 = vcmask 1041409
    %v200 = vsel %vm199, %v198, %v194
    %v202 = vsel %vm186, %v200, -1e+09
    %vm203 = vcmask 58368
    %v204 = vsel %vm203, %v202, -inf
    %205 = vmax.xlane.f32.xlu0 %v204
    %v206 = vpop.xlane.xlu0 %205
    %v207 = vsub.f32 %v202, %v206
    %v208 = vmul.f32 %v207, 1.442695
    %v209 = vpow.pop %v208
    %v210 = vsel %vm203, %v209, 0.0
    %211 = vadd.xlane.f32.xlu0 %v210
    %v212 = vpop.xlane.xlu0 %211
    %v213 = vrcp.pop %v212
    %v214 = vmul.f32 %v212, %v213
    %v215 = vsub.f32 2.0, %v214
    %v216 = vmul.f32 %v213, %v215
    %v217 = vmul.f32 %v209, %v216
    %218 = vst.msk [vmem:[#allocation9] sm:$0x3] %vm203, %v217
    %v219 = vlaneseq
    %v220 = vshrl.u32 %v219, 7
    %v221 = vsub.s32 0, %v220
    %v222 = vrot.slane %v217, %v221
    %224 = vbcast.lane.b32.xlu0 %v222, 256
    %v225 = vpop.permute.xlu0 %224
    %v226 = vlaneseq
    %v227 = vshrl.u32 %v226, 7
    %v228 = vsub.s32 1, %v227
    %v229 = vrot.slane %v217, %v228
    %231 = vbcast.lane.b32.xlu0 %v229, 256
    %v232 = vpop.permute.xlu0 %231
    %v233 = vmul.f32 %v225, %v71
    %v234 = vmul.f32 %v232, %v72
    %v235 = vsel %vm89, %v233, 0.0
    %v236 = vrot.slane %v235, 4
    %v237 = vadd.f32 %v235, %v236
    %v238 = vrot.slane %v237, 2
    %v239 = vadd.f32 %v237, %v238
    %v240 = vrot.slane %v239, 1
    %v241 = vadd.f32 %v239, %v240
    %v242 = vsel %vm89, %v234, 0.0
    %v243 = vrot.slane %v242, 4
    %v244 = vadd.f32 %v242, %v243
    %v245 = vrot.slane %v244, 2
    %v246 = vadd.f32 %v244, %v245
    %v247 = vrot.slane %v246, 1
    %v248 = vadd.f32 %v246, %v247
    %v249 = vld [vmem:[#allocation7] sm:$0xff]
    %v250 = vld [vmem:[#allocation7 + $0x8] sm:$0xff]
    %v251 = vld [vmem:[#allocation7 + $0x10] sm:$0xff]
    %v252 = vld [vmem:[#allocation7 + $0x18] sm:$0xff]
    %v253 = vld [vmem:[#allocation7 + $0x20] sm:$0xff]
    %v254 = vld [vmem:[#allocation7 + $0x28] sm:$0xff]
    %v255 = vld [vmem:[#allocation7 + $0x30] sm:$0xff]
    %v256 = vld [vmem:[#allocation7 + $0x38] sm:$0xff]
    %v257 = vld [vmem:[%s6] sm:$0x1]
    %v259 = vlaneseq
    %v260 = vshrl.u32 %v259, 7
    %v261 = vsub.s32 0, %v260
    %v262 = vrot.slane %v257, %v261
    %v266 = vsel %vm199, %v248, %v241
    %v267 = vsel %vm89, %v266, 0
    %269 = vmatprep.subr.mxu0 0.0
    %270 = vmatpush1.msra.mxu0 %v249
    %271 = vmatprep.subr.mxu0 0.0
    %272 = vmatpush1.msra.mxu0 %v250
    %273 = vmatprep.subr.mxu0 0.0
    %274 = vmatpush1.msra.mxu0 %v251
    %275 = vmatprep.subr.mxu0 0.0
    %276 = vmatpush1.msra.mxu0 %v252
    %277 = vmatprep.subr.mxu0 0.0
    %278 = vmatpush1.msra.mxu0 %v253
    %279 = vmatprep.subr.mxu0 0.0
    %280 = vmatpush1.msra.mxu0 %v254
    %281 = vmatprep.subr.mxu0 0.0
    %282 = vmatpush1.msra.mxu0 %v255
    %283 = vmatprep.subr.mxu0 0.0
    %284 = vmatpush1.msra.mxu0 %v256
    %285 = vmatprep.subr.mxu0 0.0
    %286 = vmatpush1.msra.mxu0 0.0
    %287 = vmatprep.subr.mxu0 0.0
    %288 = vmatpush1.msra.mxu0 0.0
    %289 = vmatprep.subr.mxu0 0.0
    %290 = vmatpush1.msra.mxu0 0.0
    %291 = vmatprep.subr.mxu0 0.0
    %292 = vmatpush1.msra.mxu0 0.0
    %293 = vmatprep.subr.mxu0 0.0
    %294 = vmatpush1.msra.mxu0 0.0
    %295 = vmatprep.subr.mxu0 0.0
    %296 = vmatpush1.msra.mxu0 0.0
    %297 = vmatprep.subr.mxu0 0.0
    %298 = vmatpush1.msra.mxu0 0.0
    %299 = vmatprep.subr.mxu0 0.0
    %300 = vmatpush1.msra.mxu0 0.0
    %301 = vmatprep.subr.mxu0 0.0
    %302 = vmatpush1.msra.mxu0 0.0
    %303 = vmatprep.subr.mxu0 0.0
    %304 = vmatpush1.msra.mxu0 0.0
    %305 = vmatprep.subr.mxu0 0.0
    %306 = vmatpush1.msra.mxu0 0.0
    %307 = vmatprep.subr.mxu0 0.0
    %308 = vmatpush1.msra.mxu0 0.0
    %309 = vmatprep.subr.mxu0 0.0
    %310 = vmatpush1.msra.mxu0 0.0
    %311 = vmatprep.subr.mxu0 0.0
    %312 = vmatpush1.msra.mxu0 0.0
    %313 = vmatprep.subr.mxu0 0.0
    %314 = vmatpush1.msra.mxu0 0.0
    %315 = vmatprep.subr.mxu0 0.0
    %316 = vmatpush1.msra.mxu0 0.0
    %317 = vmatprep.subr.mxu0 0.0
    %318 = vmatpush1.msra.mxu0 0.0
    %319 = vmatprep.subr.mxu0 0.0
    %320 = vmatpush1.msra.mxu0 0.0
    %321 = vmatprep.subr.mxu0 0.0
    %322 = vmatpush1.msra.mxu0 0.0
    %323 = vmatprep.subr.mxu0 0.0
    %324 = vmatpush1.msra.mxu0 0.0
    %325 = vmatprep.subr.mxu0 0.0
    %326 = vmatpush1.msra.mxu0 0.0
    %327 = vmatprep.subr.mxu0 0.0
    %328 = vmatpush1.msra.mxu0 0.0
    %329 = vmatprep.subr.mxu0 0.0
    %330 = vmatpush1.msra.mxu0 0.0
    %331 = vmatprep.subr.mxu0 0.0
    %332 = vmatpush1.msra.mxu0 0.0
    %333 = vmatprep.mubr.f32.mxu0 0.0
    %334 = vmatmul.mubr.f32.gmra.mrb[0].mxu0 %v267
    %v335 = vpop.f32.mrb[0].mxu0
    %v336 = vadd.f32 %v262, %v335
    %v337 = vpop.f32.mrb[0].mxu0
    %338 = vdwg.mxu0
    %339 = vst [vmem:[#allocation8] sm:$0x3] %v336
    // Predicated region
    $region42: #{tpu_custom_call.1} parent=1 // pred_check
      _
    $region43: #{tpu_custom_call.1} parent=1 // pred_check_branch
      %341 = sbr.rel (0) target = $region45
    $region44: #{tpu_custom_call.1} parent=1 // pred_region
      %s343 = ssub.s32 32, 32
      %344 = vsyncadd [#allocation4], %s343
      %s346 = sshll.u32 [#allocation8], 4
      %s347 = int_to_ptr.vmem [resolvable:$true] %s346
      %349 = dma.vmem_to_hbm [thread:$0]  %s347, 32, %s7, [#allocation4]
    $region45: #{tpu_custom_call.1} parent=1 // pred_fallthru
      _
    // Predicated region
    $region46: #{tpu_custom_call.1} parent=1 // pred_check
      _
    $region47: #{tpu_custom_call.1} parent=1 // pred_check_branch
      %351 = sbr.rel (0) target = $region49
    $region48: #{tpu_custom_call.1} parent=1 // pred_region
      %s353 = ssub.s32 32, 32
      %354 = vsyncadd [#allocation10], %s353
      %s356 = sshll.u32 [#allocation9], 4
      %s357 = int_to_ptr.vmem [resolvable:$true] %s356
      %359 = dma.vmem_to_hbm [thread:$0]  %s357, 32, %s8, [#allocation10]
    $region49: #{tpu_custom_call.1} parent=1 // pred_fallthru
      _
    // Predicated region
    $region50: #{tpu_custom_call.1} parent=1 // pred_check
      _
    $region51: #{tpu_custom_call.1} parent=1 // pred_check_branch
      %361 = sbr.rel (0) target = $region53
    $region52: #{tpu_custom_call.1} parent=1 // pred_region
      %362 = dma.done [#allocation4], 32
    $region53: #{tpu_custom_call.1} parent=1 // pred_fallthru
      _
    // Predicated region
    $region54: #{tpu_custom_call.1} parent=1 // pred_check
      _
    $region55: #{tpu_custom_call.1} parent=1 // pred_check_branch
      %364 = sbr.rel (0) target = $region57
    $region56: #{tpu_custom_call.1} parent=1 // pred_region
      %365 = dma.done [#allocation10], 32
    $region57: #{tpu_custom_call.1} parent=1 // pred_fallthru
      _
    %366 = vsyncpa [#allocation3], 1
    %367 = vsyncpa [#allocation6], 1
    %368 = vsyncpa [#allocation4], 1
    %369 = vsyncpa [#allocation10], 1

</llo_original>
